<compile_context>
chip_gen: v7x
topology: tpu7x:2x2x1
jax: 0.10.0
libtpu: 0.0.40
codegen_flags: <defaults>
</compile_context>

<pallas_src>
import jax
import jax.numpy as jnp
import numpy as np
from jax import lax
from jax.experimental import pallas as pl
from jax.experimental.pallas import tpu as pltpu


# --------------------------------------------------------------------------
# Pallas kernel: in-kernel one-hot im2col, fused embed+conv matmul, ReLU,
# hoisted LSTM input projection, serial LSTM recurrence, fused padded heads.
# --------------------------------------------------------------------------
def hybridnet_kernel(txt_ref, pers_ref,
                     wconv_ref, convb_ref,
                     wih_ref, whh_ref, lstm_b_ref,
                     hw_h_ref, hw_p_ref, hb_ref,
                     out_ref):
    B = pers_ref.shape[0]
    SB = txt_ref.shape[0] - 2 * B                 # S*B time-major rows
    S = SB // B
    V3, H = wconv_ref.shape                       # (3*vocab, hidden)
    V = V3 // 3

    # ---- 3-tap token indices from the (-1)-padded time-major column --------
    # Row r = s*B + b of the padded ref holds token (s-1, b); static sublane-
    # offset slices give the prev / cur / next taps directly (pad rows = -1).
    prev_ids = txt_ref[0:SB, :]                   # token at s-1 (-1 at s=0)
    cur_ids = txt_ref[B:B + SB, :]                # token at s
    next_ids = txt_ref[2 * B:2 * B + SB, :]       # token at s+1 (-1 at s=S-1)

    # ---- one-hot "im2col over tokens": (S*B, 3V), exact in bf16 -------------
    iota = lax.broadcasted_iota(jnp.int32, (SB, V3), 1)
    onehot = ((iota == prev_ids) |
              (iota == (cur_ids + V)) |
              (iota == jnp.where(next_ids >= 0, next_ids + 2 * V, -1))
              ).astype(jnp.bfloat16)

    # ---- fused embedding + Conv1d(k=3, pad=1) + ReLU: one MXU matmul --------
    y = jnp.dot(onehot, wconv_ref[...], preferred_element_type=jnp.float32)
    y = jnp.maximum(y + convb_ref[...], 0.0)                   # (S*B, H) f32

    # ---- hoisted LSTM input projection + fused bias (outside recurrence) ----
    gates_x = (jnp.dot(y.astype(jnp.bfloat16), wih_ref[...],
                       preferred_element_type=jnp.float32)
               + lstm_b_ref[...])                              # (S*B, 4H) f32

    # ---- LSTM recurrence (batch_first), gate columns permuted to [i,f,o,g] --
    whh = whh_ref[...]                                         # (H, 4H) bf16
    h = jnp.zeros((B, H), jnp.float32)
    c = jnp.zeros((B, H), jnp.float32)
    for t in range(S):   # small static S -> unrolled; TODO(synk): fori_loop when S grows
        g = gates_x[t * B:(t + 1) * B, :] + jnp.dot(
            h.astype(jnp.bfloat16), whh, preferred_element_type=jnp.float32)
        sig = jax.nn.sigmoid(g[:, 0:3 * H])                    # i, f, o (contiguous)
        th = jnp.tanh(g[:, 3 * H:4 * H])                       # g gate
        c = sig[:, H:2 * H] * c + sig[:, 0:H] * th
        h = sig[:, 2 * H:3 * H] * jnp.tanh(c)

    # ---- fused + lane-padded heads: one unmasked (B, 128) store --------------
    logits = (jnp.dot(h.astype(jnp.bfloat16), hw_h_ref[...],
                      preferred_element_type=jnp.float32)
              + jnp.dot(pers_ref[...].astype(jnp.bfloat16), hw_p_ref[...],
                        preferred_element_type=jnp.float32)
              + hb_ref[...])                                   # (B, 128) f32
    out_ref[...] = logits


# --------------------------------------------------------------------------
# Wrapper: minimal index prep (transpose + pad + flatten), single pallas_call
# --------------------------------------------------------------------------
def hybridnet_forward(text, personality, kparams):
    B, S = text.shape

    # time-major tokens, -1 padded at both temporal ends, flattened to one
    # ((S+2)*B, 1) column: row r = s*B + b holds token (s-1, b).
    t_tm = jnp.transpose(text).astype(jnp.int32)                   # (S, B)
    t_pad = jnp.pad(t_tm, ((1, 1), (0, 0)), constant_values=-1)    # (S+2, B)
    txt = t_pad.reshape((S + 2) * B, 1)

    vmem = pl.BlockSpec(memory_space=pltpu.MemorySpace.VMEM)
    fn = pl.pallas_call(
        hybridnet_kernel,
        out_shape=jax.ShapeDtypeStruct((B, 128), jnp.float32),
        in_specs=[vmem] * 10,
        out_specs=vmem,
    )
    logits = fn(txt, personality,
                kparams['wconv'], kparams['convb'],
                kparams['w_ih'], kparams['w_hh'], kparams['lstm_b'],
                kparams['head_w_h'], kparams['head_w_p'], kparams['head_b'])
    # split the fused lane-padded output back into the two heads
    return logits[:, 0:10], logits[:, 10:19]


# --------------------------------------------------------------------------
# Deterministic synthetic parameters (shapes follow HybridNet.__init__)
# --------------------------------------------------------------------------
def init_params(key, vocab_size, embed_size, hidden_size, personality_size):
    ks = jax.random.split(key, 10)
    s = 0.1
    E, H, P = embed_size, hidden_size, personality_size
    return dict(
        embedding=jax.random.normal(ks[0], (vocab_size, E), jnp.float32) * s,
        # PyTorch conv1 weight is (H, E, 3); stored here tap-major as (3, E, H)
        conv_w=jax.random.normal(ks[1], (3, E, H), jnp.float32) * s,
        conv_b=jax.random.normal(ks[2], (1, 1, H), jnp.float32) * s,
        # PyTorch weight_ih_l0 / weight_hh_l0 are (4H, H); pre-transposed to (H, 4H)
        w_ih=jax.random.normal(ks[3], (H, 4 * H), jnp.float32) * s,
        w_hh=jax.random.normal(ks[4], (H, 4 * H), jnp.float32) * s,
        lstm_b=jax.random.normal(ks[5], (1, 4 * H), jnp.float32) * s,  # b_ih + b_hh
        # fc: (10, H+P) -> stored (H+P, 10); fc_emotion: (9, H+P) -> (H+P, 9)
        fc_w=jax.random.normal(ks[6], (H + P, 10), jnp.float32) * s,
        fc_b=jax.random.normal(ks[7], (1, 10), jnp.float32) * s,
        fce_w=jax.random.normal(ks[8], (H + P, 9), jnp.float32) * s,
        fce_b=jax.random.normal(ks[9], (1, 9), jnp.float32) * s,
    )


# One-time weight folding for the kernel (pure weight transforms, no inputs).
def prepare_kernel_params(params):
    H = params['w_hh'].shape[0]

    def permute_gates_cols(w):
        # PyTorch LSTM gate order [i, f, g, o] -> [i, f, o, g]: the three
        # sigmoid gates become one contiguous 3H slab, tanh gets its own H slab.
        return jnp.concatenate(
            [w[:, 0:2 * H], w[:, 3 * H:4 * H], w[:, 2 * H:3 * H]], axis=1)

    # Fold embedding lookup into the conv weights: block k = embedding @ conv_w[k]
    wconv = jnp.concatenate(
        [params['embedding'] @ params['conv_w'][k] for k in range(3)], axis=0)  # (3V, H)

    # Fuse the two heads, pad to 128 lanes, split into hidden-/personality-part
    head_w = jnp.concatenate([params['fc_w'], params['fce_w']], axis=1)         # (H+P, 19)
    head_b = jnp.concatenate([params['fc_b'], params['fce_b']], axis=1)         # (1, 19)
    pad = 128 - head_w.shape[1]
    head_w = jnp.pad(head_w, ((0, 0), (0, pad)))
    head_b = jnp.pad(head_b, ((0, 0), (0, pad)))

    return dict(
        wconv=wconv.astype(jnp.bfloat16),
        convb=params['conv_b'].reshape(1, -1),                     # (1, H) f32
        w_ih=permute_gates_cols(params['w_ih']).astype(jnp.bfloat16),
        w_hh=permute_gates_cols(params['w_hh']).astype(jnp.bfloat16),
        lstm_b=permute_gates_cols(params['lstm_b']),               # (1, 4H) f32
        head_w_h=head_w[:H].astype(jnp.bfloat16),                  # (H, 128)
        head_w_p=head_w[H:].astype(jnp.bfloat16),                  # (P, 128)
        head_b=head_b,                                             # (1, 128) f32
    )


# --------------------------------------------------------------------------
# Pure-JAX reference (original, unfused f32 math) for correctness checking
# --------------------------------------------------------------------------
def hybridnet_reference(text, personality, params):
    emb = jnp.take(params['embedding'], text, axis=0)
    B, S, E = emb.shape
    H = params['w_hh'].shape[0]
    xpad = jnp.pad(emb, ((0, 0), (1, 1), (0, 0)))
    y = sum(jnp.einsum('bse,eh->bsh', xpad[:, k:k + S, :], params['conv_w'][k])
            for k in range(3)) + params['conv_b']
    y = jnp.maximum(y, 0.0)
    h = jnp.zeros((B, H), jnp.float32)
    c = jnp.zeros((B, H), jnp.float32)
    for t in range(S):
        gates = y[:, t, :] @ params['w_ih'] + h @ params['w_hh'] + params['lstm_b']
        i_g = jax.nn.sigmoid(gates[:, 0:H])
        f_g = jax.nn.sigmoid(gates[:, H:2 * H])
        g_g = jnp.tanh(gates[:, 2 * H:3 * H])
        o_g = jax.nn.sigmoid(gates[:, 3 * H:4 * H])
        c = f_g * c + i_g * g_g
        h = o_g * jnp.tanh(c)
    feat = jnp.concatenate([h, personality], axis=1)
    return feat @ params['fc_w'] + params['fc_b'], feat @ params['fce_w'] + params['fce_b']


if __name__ == "__main__":
    B, S = 2, 8
    vocab_size, embed_size, hidden_size, personality_size = 50, 16, 32, 8

    key = jax.random.PRNGKey(0)
    k_par, k_txt, k_per = jax.random.split(key, 3)

    params = init_params(k_par, vocab_size, embed_size, hidden_size, personality_size)
    text = jax.random.randint(k_txt, (B, S), 0, vocab_size, dtype=jnp.int32)
    personality = jax.random.normal(k_per, (B, personality_size), jnp.float32)

    kparams = prepare_kernel_params(params)
    class_out, emotion_out = hybridnet_forward(text, personality, kparams)
    jax.block_until_ready((class_out, emotion_out))

    ref_class, ref_emotion = hybridnet_reference(text, personality, params)
    # bf16 MXU operands -> tolerance loosened vs. the f32 reference
    np.testing.assert_allclose(np.asarray(class_out), np.asarray(ref_class),
                               rtol=2e-2, atol=2e-2)
    np.testing.assert_allclose(np.asarray(emotion_out), np.asarray(ref_emotion),
                               rtol=2e-2, atol=2e-2)

    assert class_out.shape == (B, 10) and emotion_out.shape == (B, 9)
    print("KERNEL_OK")
</pallas_src>

<mosaic_0001>
module attributes {stable_mosaic.version = 11 : i64} {
  func.func @hybridnet_kernel(%arg0: memref<20x1xi32, #tpu.memory_space<vmem>>, %arg1: memref<2x8xf32, #tpu.memory_space<vmem>>, %arg2: memref<150x32xbf16, #tpu.memory_space<vmem>>, %arg3: memref<1x32xf32, #tpu.memory_space<vmem>>, %arg4: memref<32x128xbf16, #tpu.memory_space<vmem>>, %arg5: memref<32x128xbf16, #tpu.memory_space<vmem>>, %arg6: memref<1x128xf32, #tpu.memory_space<vmem>>, %arg7: memref<32x128xbf16, #tpu.memory_space<vmem>>, %arg8: memref<8x128xbf16, #tpu.memory_space<vmem>>, %arg9: memref<1x128xf32, #tpu.memory_space<vmem>>, %arg10: memref<2x128xf32, #tpu.memory_space<vmem>>) attributes {dimension_semantics = [], scalar_prefetch = 0 : i64, scratch_operands = 0 : i64, tpu.core_type = #tpu.core_type<tc>} {
    %c0 = arith.constant 0 : index
    %c0_0 = arith.constant 0 : index
    %0 = vector.load %arg0[%c0, %c0_0] : memref<20x1xi32, #tpu.memory_space<vmem>>, vector<16x1xi32>
    %c2 = arith.constant 2 : index
    %c0_1 = arith.constant 0 : index
    %1 = vector.load %arg0[%c2, %c0_1] : memref<20x1xi32, #tpu.memory_space<vmem>>, vector<16x1xi32>
    %c4 = arith.constant 4 : index
    %c0_2 = arith.constant 0 : index
    %2 = vector.load %arg0[%c4, %c0_2] : memref<20x1xi32, #tpu.memory_space<vmem>>, vector<16x1xi32>
    %3 = tpu.iota {dimensions = array<i32: 1>} : vector<16x150xi32>
    %4 = vector.broadcast %0 : vector<16x1xi32> to vector<16x150xi32>
    %5 = arith.cmpi eq, %3, %4 : vector<16x150xi32>
    %c50_i32 = arith.constant 50 : i32
    %6 = vector.broadcast %c50_i32 : i32 to vector<16x1xi32>
    %7 = arith.addi %1, %6 : vector<16x1xi32>
    %8 = vector.broadcast %7 : vector<16x1xi32> to vector<16x150xi32>
    %9 = arith.cmpi eq, %3, %8 : vector<16x150xi32>
    %10 = arith.ori %5, %9 : vector<16x150xi1>
    %c0_i32 = arith.constant 0 : i32
    %11 = vector.broadcast %c0_i32 : i32 to vector<16x1xi32>
    %12 = arith.cmpi sge, %2, %11 : vector<16x1xi32>
    %c100_i32 = arith.constant 100 : i32
    %13 = vector.broadcast %c100_i32 : i32 to vector<16x1xi32>
    %14 = arith.addi %2, %13 : vector<16x1xi32>
    %c-1_i32 = arith.constant -1 : i32
    %15 = vector.broadcast %c-1_i32 : i32 to vector<16x1xi32>
    %16 = arith.select %12, %14, %15 : vector<16x1xi1>, vector<16x1xi32>
    %17 = vector.broadcast %16 : vector<16x1xi32> to vector<16x150xi32>
    %18 = arith.cmpi eq, %3, %17 : vector<16x150xi32>
    %19 = arith.ori %10, %18 : vector<16x150xi1>
    %20 = arith.extui %19 : vector<16x150xi1> to vector<16x150xi32>
    %21 = arith.sitofp %20 : vector<16x150xi32> to vector<16x150xf32>
    %22 = arith.truncf %21 : vector<16x150xf32> to vector<16x150xbf16>
    %c0_3 = arith.constant 0 : index
    %c0_4 = arith.constant 0 : index
    %23 = vector.load %arg2[%c0_3, %c0_4] : memref<150x32xbf16, #tpu.memory_space<vmem>>, vector<150x32xbf16>
    %cst = arith.constant dense<0.000000e+00> : vector<16x32xf32>
    %24 = tpu.matmul %22, %23, %cst {dimension_numbers = #tpu.dot_dimension_numbers<[1], [0], [0], [1], [0, 0, 1, 1], [], []>} : vector<16x150xbf16>, vector<150x32xbf16>, vector<16x32xf32> -> vector<16x32xf32>
    %c0_5 = arith.constant 0 : index
    %c0_6 = arith.constant 0 : index
    %25 = vector.load %arg3[%c0_5, %c0_6] : memref<1x32xf32, #tpu.memory_space<vmem>>, vector<1x32xf32>
    %26 = vector.broadcast %25 : vector<1x32xf32> to vector<16x32xf32>
    %27 = arith.addf %24, %26 : vector<16x32xf32>
    %cst_7 = arith.constant 0.000000e+00 : f32
    %28 = vector.broadcast %cst_7 : f32 to vector<16x32xf32>
    %29 = arith.maximumf %27, %28 : vector<16x32xf32>
    %30 = arith.truncf %29 : vector<16x32xf32> to vector<16x32xbf16>
    %c0_8 = arith.constant 0 : index
    %c0_9 = arith.constant 0 : index
    %31 = vector.load %arg4[%c0_8, %c0_9] : memref<32x128xbf16, #tpu.memory_space<vmem>>, vector<32x128xbf16>
    %cst_10 = arith.constant dense<0.000000e+00> : vector<16x128xf32>
    %32 = tpu.matmul %30, %31, %cst_10 {dimension_numbers = #tpu.dot_dimension_numbers<[1], [0], [0], [1], [0, 0, 1, 1], [], []>} : vector<16x32xbf16>, vector<32x128xbf16>, vector<16x128xf32> -> vector<16x128xf32>
    %c0_11 = arith.constant 0 : index
    %c0_12 = arith.constant 0 : index
    %33 = vector.load %arg6[%c0_11, %c0_12] : memref<1x128xf32, #tpu.memory_space<vmem>>, vector<1x128xf32>
    %34 = vector.broadcast %33 : vector<1x128xf32> to vector<16x128xf32>
    %35 = arith.addf %32, %34 : vector<16x128xf32>
    %c0_13 = arith.constant 0 : index
    %c0_14 = arith.constant 0 : index
    %36 = vector.load %arg5[%c0_13, %c0_14] : memref<32x128xbf16, #tpu.memory_space<vmem>>, vector<32x128xbf16>
    %cst_15 = arith.constant 0.000000e+00 : f32
    %37 = vector.broadcast %cst_15 : f32 to vector<2x32xf32>
    %cst_16 = arith.constant 0.000000e+00 : f32
    %38 = vector.broadcast %cst_16 : f32 to vector<2x32xf32>
    %39 = vector.extract_strided_slice %35 {offsets = [0, 0], sizes = [2, 128], strides = [1, 1]} : vector<16x128xf32> to vector<2x128xf32>
    %40 = arith.truncf %37 : vector<2x32xf32> to vector<2x32xbf16>
    %cst_17 = arith.constant dense<0.000000e+00> : vector<2x128xf32>
    %41 = tpu.matmul %40, %36, %cst_17 {dimension_numbers = #tpu.dot_dimension_numbers<[1], [0], [0], [1], [0, 0, 1, 1], [], []>} : vector<2x32xbf16>, vector<32x128xbf16>, vector<2x128xf32> -> vector<2x128xf32>
    %42 = arith.addf %39, %41 : vector<2x128xf32>
    %43 = vector.extract_strided_slice %42 {offsets = [0, 0], sizes = [2, 96], strides = [1, 1]} : vector<2x128xf32> to vector<2x96xf32>
    %44 = arith.negf %43 : vector<2x96xf32>
    %45 = math.exp %44 : vector<2x96xf32>
    %cst_18 = arith.constant 1.000000e+00 : f32
    %46 = vector.broadcast %cst_18 : f32 to vector<2x96xf32>
    %47 = arith.addf %46, %45 : vector<2x96xf32>
    %48 = arith.divf %46, %47 : vector<2x96xf32>
    %49 = vector.extract_strided_slice %42 {offsets = [0, 96], sizes = [2, 32], strides = [1, 1]} : vector<2x128xf32> to vector<2x32xf32>
    %50 = math.tanh %49 : vector<2x32xf32>
    %51 = vector.extract_strided_slice %48 {offsets = [0, 32], sizes = [2, 32], strides = [1, 1]} : vector<2x96xf32> to vector<2x32xf32>
    %52 = arith.mulf %51, %38 : vector<2x32xf32>
    %53 = vector.extract_strided_slice %48 {offsets = [0, 0], sizes = [2, 32], strides = [1, 1]} : vector<2x96xf32> to vector<2x32xf32>
    %54 = arith.mulf %53, %50 : vector<2x32xf32>
    %55 = arith.addf %52, %54 : vector<2x32xf32>
    %56 = vector.extract_strided_slice %48 {offsets = [0, 64], sizes = [2, 32], strides = [1, 1]} : vector<2x96xf32> to vector<2x32xf32>
    %57 = math.tanh %55 : vector<2x32xf32>
    %58 = arith.mulf %56, %57 : vector<2x32xf32>
    %59 = vector.extract_strided_slice %35 {offsets = [2, 0], sizes = [2, 128], strides = [1, 1]} : vector<16x128xf32> to vector<2x128xf32>
    %60 = arith.truncf %58 : vector<2x32xf32> to vector<2x32xbf16>
    %cst_19 = arith.constant dense<0.000000e+00> : vector<2x128xf32>
    %61 = tpu.matmul %60, %36, %cst_19 {dimension_numbers = #tpu.dot_dimension_numbers<[1], [0], [0], [1], [0, 0, 1, 1], [], []>} : vector<2x32xbf16>, vector<32x128xbf16>, vector<2x128xf32> -> vector<2x128xf32>
    %62 = arith.addf %59, %61 : vector<2x128xf32>
    %63 = vector.extract_strided_slice %62 {offsets = [0, 0], sizes = [2, 96], strides = [1, 1]} : vector<2x128xf32> to vector<2x96xf32>
    %64 = arith.negf %63 : vector<2x96xf32>
    %65 = math.exp %64 : vector<2x96xf32>
    %cst_20 = arith.constant 1.000000e+00 : f32
    %66 = vector.broadcast %cst_20 : f32 to vector<2x96xf32>
    %67 = arith.addf %66, %65 : vector<2x96xf32>
    %68 = arith.divf %66, %67 : vector<2x96xf32>
    %69 = vector.extract_strided_slice %62 {offsets = [0, 96], sizes = [2, 32], strides = [1, 1]} : vector<2x128xf32> to vector<2x32xf32>
    %70 = math.tanh %69 : vector<2x32xf32>
    %71 = vector.extract_strided_slice %68 {offsets = [0, 32], sizes = [2, 32], strides = [1, 1]} : vector<2x96xf32> to vector<2x32xf32>
    %72 = arith.mulf %71, %55 : vector<2x32xf32>
    %73 = vector.extract_strided_slice %68 {offsets = [0, 0], sizes = [2, 32], strides = [1, 1]} : vector<2x96xf32> to vector<2x32xf32>
    %74 = arith.mulf %73, %70 : vector<2x32xf32>
    %75 = arith.addf %72, %74 : vector<2x32xf32>
    %76 = vector.extract_strided_slice %68 {offsets = [0, 64], sizes = [2, 32], strides = [1, 1]} : vector<2x96xf32> to vector<2x32xf32>
    %77 = math.tanh %75 : vector<2x32xf32>
    %78 = arith.mulf %76, %77 : vector<2x32xf32>
    %79 = vector.extract_strided_slice %35 {offsets = [4, 0], sizes = [2, 128], strides = [1, 1]} : vector<16x128xf32> to vector<2x128xf32>
    %80 = arith.truncf %78 : vector<2x32xf32> to vector<2x32xbf16>
    %cst_21 = arith.constant dense<0.000000e+00> : vector<2x128xf32>
    %81 = tpu.matmul %80, %36, %cst_21 {dimension_numbers = #tpu.dot_dimension_numbers<[1], [0], [0], [1], [0, 0, 1, 1], [], []>} : vector<2x32xbf16>, vector<32x128xbf16>, vector<2x128xf32> -> vector<2x128xf32>
    %82 = arith.addf %79, %81 : vector<2x128xf32>
    %83 = vector.extract_strided_slice %82 {offsets = [0, 0], sizes = [2, 96], strides = [1, 1]} : vector<2x128xf32> to vector<2x96xf32>
    %84 = arith.negf %83 : vector<2x96xf32>
    %85 = math.exp %84 : vector<2x96xf32>
    %cst_22 = arith.constant 1.000000e+00 : f32
    %86 = vector.broadcast %cst_22 : f32 to vector<2x96xf32>
    %87 = arith.addf %86, %85 : vector<2x96xf32>
    %88 = arith.divf %86, %87 : vector<2x96xf32>
    %89 = vector.extract_strided_slice %82 {offsets = [0, 96], sizes = [2, 32], strides = [1, 1]} : vector<2x128xf32> to vector<2x32xf32>
    %90 = math.tanh %89 : vector<2x32xf32>
    %91 = vector.extract_strided_slice %88 {offsets = [0, 32], sizes = [2, 32], strides = [1, 1]} : vector<2x96xf32> to vector<2x32xf32>
    %92 = arith.mulf %91, %75 : vector<2x32xf32>
    %93 = vector.extract_strided_slice %88 {offsets = [0, 0], sizes = [2, 32], strides = [1, 1]} : vector<2x96xf32> to vector<2x32xf32>
    %94 = arith.mulf %93, %90 : vector<2x32xf32>
    %95 = arith.addf %92, %94 : vector<2x32xf32>
    %96 = vector.extract_strided_slice %88 {offsets = [0, 64], sizes = [2, 32], strides = [1, 1]} : vector<2x96xf32> to vector<2x32xf32>
    %97 = math.tanh %95 : vector<2x32xf32>
    %98 = arith.mulf %96, %97 : vector<2x32xf32>
    %99 = vector.extract_strided_slice %35 {offsets = [6, 0], sizes = [2, 128], strides = [1, 1]} : vector<16x128xf32> to vector<2x128xf32>
    %100 = arith.truncf %98 : vector<2x32xf32> to vector<2x32xbf16>
    %cst_23 = arith.constant dense<0.000000e+00> : vector<2x128xf32>
    %101 = tpu.matmul %100, %36, %cst_23 {dimension_numbers = #tpu.dot_dimension_numbers<[1], [0], [0], [1], [0, 0, 1, 1], [], []>} : vector<2x32xbf16>, vector<32x128xbf16>, vector<2x128xf32> -> vector<2x128xf32>
    %102 = arith.addf %99, %101 : vector<2x128xf32>
    %103 = vector.extract_strided_slice %102 {offsets = [0, 0], sizes = [2, 96], strides = [1, 1]} : vector<2x128xf32> to vector<2x96xf32>
    %104 = arith.negf %103 : vector<2x96xf32>
    %105 = math.exp %104 : vector<2x96xf32>
    %cst_24 = arith.constant 1.000000e+00 : f32
    %106 = vector.broadcast %cst_24 : f32 to vector<2x96xf32>
    %107 = arith.addf %106, %105 : vector<2x96xf32>
    %108 = arith.divf %106, %107 : vector<2x96xf32>
    %109 = vector.extract_strided_slice %102 {offsets = [0, 96], sizes = [2, 32], strides = [1, 1]} : vector<2x128xf32> to vector<2x32xf32>
    %110 = math.tanh %109 : vector<2x32xf32>
    %111 = vector.extract_strided_slice %108 {offsets = [0, 32], sizes = [2, 32], strides = [1, 1]} : vector<2x96xf32> to vector<2x32xf32>
    %112 = arith.mulf %111, %95 : vector<2x32xf32>
    %113 = vector.extract_strided_slice %108 {offsets = [0, 0], sizes = [2, 32], strides = [1, 1]} : vector<2x96xf32> to vector<2x32xf32>
    %114 = arith.mulf %113, %110 : vector<2x32xf32>
    %115 = arith.addf %112, %114 : vector<2x32xf32>
    %116 = vector.extract_strided_slice %108 {offsets = [0, 64], sizes = [2, 32], strides = [1, 1]} : vector<2x96xf32> to vector<2x32xf32>
    %117 = math.tanh %115 : vector<2x32xf32>
    %118 = arith.mulf %116, %117 : vector<2x32xf32>
    %119 = vector.extract_strided_slice %35 {offsets = [8, 0], sizes = [2, 128], strides = [1, 1]} : vector<16x128xf32> to vector<2x128xf32>
    %120 = arith.truncf %118 : vector<2x32xf32> to vector<2x32xbf16>
    %cst_25 = arith.constant dense<0.000000e+00> : vector<2x128xf32>
    %121 = tpu.matmul %120, %36, %cst_25 {dimension_numbers = #tpu.dot_dimension_numbers<[1], [0], [0], [1], [0, 0, 1, 1], [], []>} : vector<2x32xbf16>, vector<32x128xbf16>, vector<2x128xf32> -> vector<2x128xf32>
    %122 = arith.addf %119, %121 : vector<2x128xf32>
    %123 = vector.extract_strided_slice %122 {offsets = [0, 0], sizes = [2, 96], strides = [1, 1]} : vector<2x128xf32> to vector<2x96xf32>
    %124 = arith.negf %123 : vector<2x96xf32>
    %125 = math.exp %124 : vector<2x96xf32>
    %cst_26 = arith.constant 1.000000e+00 : f32
    %126 = vector.broadcast %cst_26 : f32 to vector<2x96xf32>
    %127 = arith.addf %126, %125 : vector<2x96xf32>
    %128 = arith.divf %126, %127 : vector<2x96xf32>
    %129 = vector.extract_strided_slice %122 {offsets = [0, 96], sizes = [2, 32], strides = [1, 1]} : vector<2x128xf32> to vector<2x32xf32>
    %130 = math.tanh %129 : vector<2x32xf32>
    %131 = vector.extract_strided_slice %128 {offsets = [0, 32], sizes = [2, 32], strides = [1, 1]} : vector<2x96xf32> to vector<2x32xf32>
    %132 = arith.mulf %131, %115 : vector<2x32xf32>
    %133 = vector.extract_strided_slice %128 {offsets = [0, 0], sizes = [2, 32], strides = [1, 1]} : vector<2x96xf32> to vector<2x32xf32>
    %134 = arith.mulf %133, %130 : vector<2x32xf32>
    %135 = arith.addf %132, %134 : vector<2x32xf32>
    %136 = vector.extract_strided_slice %128 {offsets = [0, 64], sizes = [2, 32], strides = [1, 1]} : vector<2x96xf32> to vector<2x32xf32>
    %137 = math.tanh %135 : vector<2x32xf32>
    %138 = arith.mulf %136, %137 : vector<2x32xf32>
    %139 = vector.extract_strided_slice %35 {offsets = [10, 0], sizes = [2, 128], strides = [1, 1]} : vector<16x128xf32> to vector<2x128xf32>
    %140 = arith.truncf %138 : vector<2x32xf32> to vector<2x32xbf16>
    %cst_27 = arith.constant dense<0.000000e+00> : vector<2x128xf32>
    %141 = tpu.matmul %140, %36, %cst_27 {dimension_numbers = #tpu.dot_dimension_numbers<[1], [0], [0], [1], [0, 0, 1, 1], [], []>} : vector<2x32xbf16>, vector<32x128xbf16>, vector<2x128xf32> -> vector<2x128xf32>
    %142 = arith.addf %139, %141 : vector<2x128xf32>
    %143 = vector.extract_strided_slice %142 {offsets = [0, 0], sizes = [2, 96], strides = [1, 1]} : vector<2x128xf32> to vector<2x96xf32>
    %144 = arith.negf %143 : vector<2x96xf32>
    %145 = math.exp %144 : vector<2x96xf32>
    %cst_28 = arith.constant 1.000000e+00 : f32
    %146 = vector.broadcast %cst_28 : f32 to vector<2x96xf32>
    %147 = arith.addf %146, %145 : vector<2x96xf32>
    %148 = arith.divf %146, %147 : vector<2x96xf32>
    %149 = vector.extract_strided_slice %142 {offsets = [0, 96], sizes = [2, 32], strides = [1, 1]} : vector<2x128xf32> to vector<2x32xf32>
    %150 = math.tanh %149 : vector<2x32xf32>
    %151 = vector.extract_strided_slice %148 {offsets = [0, 32], sizes = [2, 32], strides = [1, 1]} : vector<2x96xf32> to vector<2x32xf32>
    %152 = arith.mulf %151, %135 : vector<2x32xf32>
    %153 = vector.extract_strided_slice %148 {offsets = [0, 0], sizes = [2, 32], strides = [1, 1]} : vector<2x96xf32> to vector<2x32xf32>
    %154 = arith.mulf %153, %150 : vector<2x32xf32>
    %155 = arith.addf %152, %154 : vector<2x32xf32>
    %156 = vector.extract_strided_slice %148 {offsets = [0, 64], sizes = [2, 32], strides = [1, 1]} : vector<2x96xf32> to vector<2x32xf32>
    %157 = math.tanh %155 : vector<2x32xf32>
    %158 = arith.mulf %156, %157 : vector<2x32xf32>
    %159 = vector.extract_strided_slice %35 {offsets = [12, 0], sizes = [2, 128], strides = [1, 1]} : vector<16x128xf32> to vector<2x128xf32>
    %160 = arith.truncf %158 : vector<2x32xf32> to vector<2x32xbf16>
    %cst_29 = arith.constant dense<0.000000e+00> : vector<2x128xf32>
    %161 = tpu.matmul %160, %36, %cst_29 {dimension_numbers = #tpu.dot_dimension_numbers<[1], [0], [0], [1], [0, 0, 1, 1], [], []>} : vector<2x32xbf16>, vector<32x128xbf16>, vector<2x128xf32> -> vector<2x128xf32>
    %162 = arith.addf %159, %161 : vector<2x128xf32>
    %163 = vector.extract_strided_slice %162 {offsets = [0, 0], sizes = [2, 96], strides = [1, 1]} : vector<2x128xf32> to vector<2x96xf32>
    %164 = arith.negf %163 : vector<2x96xf32>
    %165 = math.exp %164 : vector<2x96xf32>
    %cst_30 = arith.constant 1.000000e+00 : f32
    %166 = vector.broadcast %cst_30 : f32 to vector<2x96xf32>
    %167 = arith.addf %166, %165 : vector<2x96xf32>
    %168 = arith.divf %166, %167 : vector<2x96xf32>
    %169 = vector.extract_strided_slice %162 {offsets = [0, 96], sizes = [2, 32], strides = [1, 1]} : vector<2x128xf32> to vector<2x32xf32>
    %170 = math.tanh %169 : vector<2x32xf32>
    %171 = vector.extract_strided_slice %168 {offsets = [0, 32], sizes = [2, 32], strides = [1, 1]} : vector<2x96xf32> to vector<2x32xf32>
    %172 = arith.mulf %171, %155 : vector<2x32xf32>
    %173 = vector.extract_strided_slice %168 {offsets = [0, 0], sizes = [2, 32], strides = [1, 1]} : vector<2x96xf32> to vector<2x32xf32>
    %174 = arith.mulf %173, %170 : vector<2x32xf32>
    %175 = arith.addf %172, %174 : vector<2x32xf32>
    %176 = vector.extract_strided_slice %168 {offsets = [0, 64], sizes = [2, 32], strides = [1, 1]} : vector<2x96xf32> to vector<2x32xf32>
    %177 = math.tanh %175 : vector<2x32xf32>
    %178 = arith.mulf %176, %177 : vector<2x32xf32>
    %179 = vector.extract_strided_slice %35 {offsets = [14, 0], sizes = [2, 128], strides = [1, 1]} : vector<16x128xf32> to vector<2x128xf32>
    %180 = arith.truncf %178 : vector<2x32xf32> to vector<2x32xbf16>
    %cst_31 = arith.constant dense<0.000000e+00> : vector<2x128xf32>
    %181 = tpu.matmul %180, %36, %cst_31 {dimension_numbers = #tpu.dot_dimension_numbers<[1], [0], [0], [1], [0, 0, 1, 1], [], []>} : vector<2x32xbf16>, vector<32x128xbf16>, vector<2x128xf32> -> vector<2x128xf32>
    %182 = arith.addf %179, %181 : vector<2x128xf32>
    %183 = vector.extract_strided_slice %182 {offsets = [0, 0], sizes = [2, 96], strides = [1, 1]} : vector<2x128xf32> to vector<2x96xf32>
    %184 = arith.negf %183 : vector<2x96xf32>
    %185 = math.exp %184 : vector<2x96xf32>
    %cst_32 = arith.constant 1.000000e+00 : f32
    %186 = vector.broadcast %cst_32 : f32 to vector<2x96xf32>
    %187 = arith.addf %186, %185 : vector<2x96xf32>
    %188 = arith.divf %186, %187 : vector<2x96xf32>
    %189 = vector.extract_strided_slice %182 {offsets = [0, 96], sizes = [2, 32], strides = [1, 1]} : vector<2x128xf32> to vector<2x32xf32>
    %190 = math.tanh %189 : vector<2x32xf32>
    %191 = vector.extract_strided_slice %188 {offsets = [0, 32], sizes = [2, 32], strides = [1, 1]} : vector<2x96xf32> to vector<2x32xf32>
    %192 = arith.mulf %191, %175 : vector<2x32xf32>
    %193 = vector.extract_strided_slice %188 {offsets = [0, 0], sizes = [2, 32], strides = [1, 1]} : vector<2x96xf32> to vector<2x32xf32>
    %194 = arith.mulf %193, %190 : vector<2x32xf32>
    %195 = arith.addf %192, %194 : vector<2x32xf32>
    %196 = vector.extract_strided_slice %188 {offsets = [0, 64], sizes = [2, 32], strides = [1, 1]} : vector<2x96xf32> to vector<2x32xf32>
    %197 = math.tanh %195 : vector<2x32xf32>
    %198 = arith.mulf %196, %197 : vector<2x32xf32>
    %199 = arith.truncf %198 : vector<2x32xf32> to vector<2x32xbf16>
    %c0_33 = arith.constant 0 : index
    %c0_34 = arith.constant 0 : index
    %200 = vector.load %arg7[%c0_33, %c0_34] : memref<32x128xbf16, #tpu.memory_space<vmem>>, vector<32x128xbf16>
    %cst_35 = arith.constant dense<0.000000e+00> : vector<2x128xf32>
    %201 = tpu.matmul %199, %200, %cst_35 {dimension_numbers = #tpu.dot_dimension_numbers<[1], [0], [0], [1], [0, 0, 1, 1], [], []>} : vector<2x32xbf16>, vector<32x128xbf16>, vector<2x128xf32> -> vector<2x128xf32>
    %c0_36 = arith.constant 0 : index
    %c0_37 = arith.constant 0 : index
    %202 = vector.load %arg1[%c0_36, %c0_37] : memref<2x8xf32, #tpu.memory_space<vmem>>, vector<2x8xf32>
    %203 = arith.truncf %202 : vector<2x8xf32> to vector<2x8xbf16>
    %c0_38 = arith.constant 0 : index
    %c0_39 = arith.constant 0 : index
    %204 = vector.load %arg8[%c0_38, %c0_39] : memref<8x128xbf16, #tpu.memory_space<vmem>>, vector<8x128xbf16>
    %cst_40 = arith.constant dense<0.000000e+00> : vector<2x128xf32>
    %205 = tpu.matmul %203, %204, %cst_40 {dimension_numbers = #tpu.dot_dimension_numbers<[1], [0], [0], [1], [0, 0, 1, 1], [], []>} : vector<2x8xbf16>, vector<8x128xbf16>, vector<2x128xf32> -> vector<2x128xf32>
    %206 = arith.addf %201, %205 : vector<2x128xf32>
    %c0_41 = arith.constant 0 : index
    %c0_42 = arith.constant 0 : index
    %207 = vector.load %arg9[%c0_41, %c0_42] : memref<1x128xf32, #tpu.memory_space<vmem>>, vector<1x128xf32>
    %208 = vector.broadcast %207 : vector<1x128xf32> to vector<2x128xf32>
    %209 = arith.addf %206, %208 : vector<2x128xf32>
    %c0_43 = arith.constant 0 : index
    %c0_44 = arith.constant 0 : index
    %210 = vector.load %arg10[%c0_43, %c0_44] : memref<2x128xf32, #tpu.memory_space<vmem>>, vector<2x128xf32>
    tpu.vector_store %arg10[%c0_43, %c0_44], %209 {strides = array<i32>} : memref<2x128xf32, #tpu.memory_space<vmem>>, vector<2x128xf32>,
    return
  }
}

</mosaic_0001>

<llo_original>
// kernel: tpu_custom_call.1
$region0: #{tpu_custom_call.1}
  #allocation0 [shape = 'u32[]', space=smem, size = 0x4, offset = 0x4, fixed_abs, tag = 'smem constant byte address 0x4 - core index']
  #allocation1 [shape = 'u32[144,128]{1,0:T(1,128)}', space=vmem, size = 0x12000, scoped, tag = 'internal scratch']
  %s0 = inlined_call_operand.vmem [shape: s32[20,1], index: 0, kind: input, shape index: {}]
  %s1 = inlined_call_operand.vmem [shape: f32[2,8], index: 1, kind: input, shape index: {}]
  %s2 = inlined_call_operand.vmem [shape: bf16[150,32], index: 2, kind: input, shape index: {}]
  %s3 = inlined_call_operand.vmem [shape: f32[1,32], index: 3, kind: input, shape index: {}]
  %s4 = inlined_call_operand.vmem [shape: bf16[32,128], index: 4, kind: input, shape index: {}]
  %s5 = inlined_call_operand.vmem [shape: bf16[32,128], index: 5, kind: input, shape index: {}]
  %s6 = inlined_call_operand.vmem [shape: f32[1,128], index: 6, kind: input, shape index: {}]
  %s7 = inlined_call_operand.vmem [shape: bf16[32,128], index: 7, kind: input, shape index: {}]
  %s8 = inlined_call_operand.vmem [shape: bf16[8,128], index: 8, kind: input, shape index: {}]
  %s9 = inlined_call_operand.vmem [shape: f32[1,128], index: 9, kind: input, shape index: {}]
  %s10 = inlined_call_operand.hbm [shape: f32[2,128], index: 10, kind: output, shape index: {}]
  %s11 = sld [smem:[#allocation0]]
  $region50: #{tpu_custom_call.1} parent=0
    _
  %s13 = ssub.s32 1, %s11
  %s14 = scalar_select 0, %s13, %s11
  $region1: #{tpu_custom_call.1} parent=0
    #allocation2 [shape = 'u8[1024]{0}', space=vmem, size = 0x400, scoped, tag = 'output window, operand 0, single buffered']
    #allocation3 [shape = 's32[1]{0}', space=sflag, size = 0x4, scoped, tag = 'scoped memory for tpu_custom_call.1']
    %15 = vsyncpa [#allocation3], 0
    // Predicated region
    $region2: #{tpu_custom_call.1} parent=1 // pred_check
      _
    $region3: #{tpu_custom_call.1} parent=1 // pred_check_branch
      %17 = sbr.rel (0) target = $region5
    $region4: #{tpu_custom_call.1} parent=1 // pred_region
      _
    $region5: #{tpu_custom_call.1} parent=1 // pred_fallthru
      _
    // Predicated region
    $region6: #{tpu_custom_call.1} parent=1 // pred_check
      _
    $region7: #{tpu_custom_call.1} parent=1 // pred_check_branch
      %19 = sbr.rel (0) target = $region9
    $region8: #{tpu_custom_call.1} parent=1 // pred_region
      _
    $region9: #{tpu_custom_call.1} parent=1 // pred_fallthru
      _
    // Predicated region
    $region10: #{tpu_custom_call.1} parent=1 // pred_check
      _
    $region11: #{tpu_custom_call.1} parent=1 // pred_check_branch
      %21 = sbr.rel (0) target = $region13
    $region12: #{tpu_custom_call.1} parent=1 // pred_region
      _
    $region13: #{tpu_custom_call.1} parent=1 // pred_fallthru
      _
    // Predicated region
    $region14: #{tpu_custom_call.1} parent=1 // pred_check
      _
    $region15: #{tpu_custom_call.1} parent=1 // pred_check_branch
      %23 = sbr.rel (0) target = $region17
    $region16: #{tpu_custom_call.1} parent=1 // pred_region
      _
    $region17: #{tpu_custom_call.1} parent=1 // pred_fallthru
      _
    // Predicated region
    $region18: #{tpu_custom_call.1} parent=1 // pred_check
      _
    $region19: #{tpu_custom_call.1} parent=1 // pred_check_branch
      %25 = sbr.rel (0) target = $region21
    $region20: #{tpu_custom_call.1} parent=1 // pred_region
      _
    $region21: #{tpu_custom_call.1} parent=1 // pred_fallthru
      _
    // Predicated region
    $region22: #{tpu_custom_call.1} parent=1 // pred_check
      _
    $region23: #{tpu_custom_call.1} parent=1 // pred_check_branch
      %27 = sbr.rel (0) target = $region25
    $region24: #{tpu_custom_call.1} parent=1 // pred_region
      _
    $region25: #{tpu_custom_call.1} parent=1 // pred_fallthru
      _
    // Predicated region
    $region26: #{tpu_custom_call.1} parent=1 // pred_check
      _
    $region27: #{tpu_custom_call.1} parent=1 // pred_check_branch
      %29 = sbr.rel (0) target = $region29
    $region28: #{tpu_custom_call.1} parent=1 // pred_region
      _
    $region29: #{tpu_custom_call.1} parent=1 // pred_fallthru
      _
    // Predicated region
    $region30: #{tpu_custom_call.1} parent=1 // pred_check
      _
    $region31: #{tpu_custom_call.1} parent=1 // pred_check_branch
      %31 = sbr.rel (0) target = $region33
    $region32: #{tpu_custom_call.1} parent=1 // pred_region
      _
    $region33: #{tpu_custom_call.1} parent=1 // pred_fallthru
      _
    // Predicated region
    $region34: #{tpu_custom_call.1} parent=1 // pred_check
      _
    $region35: #{tpu_custom_call.1} parent=1 // pred_check_branch
      %33 = sbr.rel (0) target = $region37
    $region36: #{tpu_custom_call.1} parent=1 // pred_region
      _
    $region37: #{tpu_custom_call.1} parent=1 // pred_fallthru
      _
    // Predicated region
    $region38: #{tpu_custom_call.1} parent=1 // pred_check
      _
    $region39: #{tpu_custom_call.1} parent=1 // pred_check_branch
      %35 = sbr.rel (0) target = $region41
    $region40: #{tpu_custom_call.1} parent=1 // pred_region
      _
    $region41: #{tpu_custom_call.1} parent=1 // pred_fallthru
      _
    %v37 = vld [vmem:[%s0] sm:$0xff]
    %v38 = vld [vmem:[%s0 + $0x8] sm:$0xff]
    %v39 = vld [vmem:[%s0 + $0x2] sm:$0xff]
    %v40 = vld [vmem:[%s0 + $0xa] sm:$0xff]
    %v41 = vld [vmem:[%s0 + $0x4] sm:$0xff]
    %v42 = vld [vmem:[%s0 + $0xc] sm:$0xff]
    %v43 = vlaneseq
    %v44 = vand.u32 %v43, 127
    %v45 = vadd.s32 %v44, 128
    %46 = vset.pattern.permute.xlu0 0
    %47 = vperm.xlu0 %46, %v37
    %v48 = vpop.permute.xlu0 %47
    %49 = vset.pattern.permute.xlu0 0
    %50 = vperm.xlu0 %49, %v38
    %v51 = vpop.permute.xlu0 %50
    %vm52 = vcmp.eq.s32.totalorder %v44, %v48
    %vm53 = vcmp.eq.s32.totalorder %v45, %v48
    %vm54 = vcmp.eq.s32.totalorder %v44, %v51
    %vm55 = vcmp.eq.s32.totalorder %v45, %v51
    %v56 = vadd.s32 %v39, 50
    %v57 = vadd.s32 %v40, 50
    %58 = vset.pattern.permute.xlu0 0
    %59 = vperm.xlu0 %58, %v56
    %v60 = vpop.permute.xlu0 %59
    %61 = vset.pattern.permute.xlu0 0
    %62 = vperm.xlu0 %61, %v57
    %v63 = vpop.permute.xlu0 %62
    %vm64 = vcmp.eq.s32.totalorder %v44, %v60
    %vm65 = vcmp.eq.s32.totalorder %v45, %v60
    %vm66 = vcmp.eq.s32.totalorder %v44, %v63
    %vm67 = vcmp.eq.s32.totalorder %v45, %v63
    %vm68 = vmor %vm52, %vm64
    %vm69 = vmor %vm53, %vm65
    %vm70 = vmor %vm54, %vm66
    %vm71 = vmor %vm55, %vm67
    %vm72 = vcmp.ge.s32.totalorder %v41, 0
    %vm73 = vcmp.ge.s32.totalorder %v42, 0
    %v74 = vadd.s32 %v41, 100
    %v75 = vadd.s32 %v42, 100
    %v76 = vsel %vm72, %v74, 4294967295
    %v77 = vsel %vm73, %v75, 4294967295
    %78 = vset.pattern.permute.xlu0 0
    %79 = vperm.xlu0 %78, %v76
    %v80 = vpop.permute.xlu0 %79
    %81 = vset.pattern.permute.xlu0 0
    %82 = vperm.xlu0 %81, %v77
    %v83 = vpop.permute.xlu0 %82
    %vm84 = vcmp.eq.s32.totalorder %v44, %v80
    %vm85 = vcmp.eq.s32.totalorder %v45, %v80
    %vm86 = vcmp.eq.s32.totalorder %v44, %v83
    %vm87 = vcmp.eq.s32.totalorder %v45, %v83
    %vm88 = vmor %vm68, %vm84
    %vm89 = vmor %vm69, %vm85
    %vm90 = vmor %vm70, %vm86
    %vm91 = vmor %vm71, %vm87
    %v92 = vsel %vm88, 1, 0
    %v93 = vsel %vm89, 1, 0
    %v94 = vsel %vm90, 1, 0
    %v95 = vsel %vm91, 1, 0
    %v96 = vcvt.s32.f32 %v92
    %v97 = vcvt.s32.f32 %v93
    %v98 = vcvt.s32.f32 %v94
    %v99 = vcvt.s32.f32 %v95
    %v100 = vpack.c.bf16 %v98, %v96
    %v101 = vpack.c.bf16 %v99, %v97
    %v102 = vld [vmem:[%s2] sm:$0xf]
    %v103 = vld [vmem:[%s2 + $0x4] sm:$0xf]
    %v104 = vld [vmem:[%s2 + $0x8] sm:$0xf]
    %v105 = vld [vmem:[%s2 + $0xc] sm:$0xf]
    %v106 = vld [vmem:[%s2 + $0x10] sm:$0xf]
    %v107 = vld [vmem:[%s2 + $0x14] sm:$0xf]
    %v108 = vld [vmem:[%s2 + $0x18] sm:$0xf]
    %v109 = vld [vmem:[%s2 + $0x1c] sm:$0xf]
    %v110 = vld [vmem:[%s2 + $0x20] sm:$0xf]
    %v111 = vld [vmem:[%s2 + $0x24] sm:$0xf]
    %v112 = vld [vmem:[%s2 + $0x28] sm:$0xf]
    %v113 = vld [vmem:[%s2 + $0x2c] sm:$0xf]
    %v114 = vld [vmem:[%s2 + $0x30] sm:$0xf]
    %v115 = vld [vmem:[%s2 + $0x34] sm:$0xf]
    %v116 = vld [vmem:[%s2 + $0x38] sm:$0xf]
    %v117 = vld [vmem:[%s2 + $0x3c] sm:$0xf]
    %v118 = vld [vmem:[%s2 + $0x40] sm:$0xf]
    %v119 = vld [vmem:[%s2 + $0x44] sm:$0xf]
    %v120 = vld [vmem:[%s2 + $0x48] sm:$0x7]
    %v121 = vld [vmem:[%s3] sm:$0x1]
    %v123 = vlaneseq
    %v124 = vshrl.u32 %v123, 7
    %v125 = vsub.s32 0, %v124
    %v126 = vrot.slane %v121, %v125
    %v147 = vunpack.c.l.b16 %v102
    %v148 = vunpack.c.l.b16 %v103
    %v149 = vunpack.c.l.b16 %v104
    %v150 = vunpack.c.l.b16 %v105
    %v151 = vunpack.c.l.b16 %v106
    %v152 = vunpack.c.l.b16 %v107
    %v153 = vunpack.c.l.b16 %v108
    %v154 = vunpack.c.l.b16 %v109
    %v155 = vunpack.c.l.b16 %v110
    %v156 = vunpack.c.l.b16 %v111
    %v157 = vunpack.c.l.b16 %v112
    %v158 = vunpack.c.l.b16 %v113
    %v159 = vunpack.c.l.b16 %v114
    %v160 = vunpack.c.l.b16 %v115
    %v161 = vunpack.c.l.b16 %v116
    %v162 = vunpack.c.l.b16 %v117
    %v163 = vunpack.c.l.b16 %v118
    %v164 = vunpack.c.l.b16 %v119
    %v165 = vunpack.c.l.b16 %v120
    %v166 = vpack.c.b16 %v148, %v147
    %v167 = vpack.c.b16 %v150, %v149
    %v168 = vpack.c.b16 %v152, %v151
    %v169 = vpack.c.b16 %v154, %v153
    %v170 = vpack.c.b16 %v156, %v155
    %v171 = vpack.c.b16 %v158, %v157
    %v172 = vpack.c.b16 %v160, %v159
    %v173 = vpack.c.b16 %v162, %v161
    %v174 = vpack.c.b16 %v164, %v163
    %v175 = vpack.c.b16 %v165, %v165
    %vm185 = vcmask 179200
    %v187 = vsel %vm185, %v101, 0
    %vm189 = vcmask 1042432
    %v191 = vsel %vm189, %v175, 0
    %193 = vmatprep.subr.bf16.mxu0 0
    %194 = vmatpush1.bf16.msra.mxu0 %v166
    %195 = vmatprep.subr.bf16.mxu0 0
    %196 = vmatpush1.bf16.msra.mxu0 %v167
    %197 = vmatprep.subr.bf16.mxu0 0
    %198 = vmatpush1.bf16.msra.mxu0 %v168
    %199 = vmatprep.subr.bf16.mxu0 0
    %200 = vmatpush1.bf16.msra.mxu0 %v169
    %201 = vmatprep.subr.bf16.mxu0 0
    %202 = vmatpush1.bf16.msra.mxu0 %v170
    %203 = vmatprep.subr.bf16.mxu0 0
    %204 = vmatpush1.bf16.msra.mxu0 %v171
    %205 = vmatprep.subr.bf16.mxu0 0
    %206 = vmatpush1.bf16.msra.mxu0 %v172
    %207 = vmatprep.subr.bf16.mxu0 0
    %208 = vmatpush1.bf16.msra.mxu0 %v173
    %209 = vmatprep.subr.bf16.mxu0 0
    %210 = vmatpush1.bf16.msra.mxu0 %v174
    %211 = vmatprep.subr.bf16.mxu0 0
    %212 = vmatpush1.bf16.msra.mxu0 %v191
    %213 = vmatprep.subr.bf16.mxu0 0
    %214 = vmatpush1.bf16.msra.mxu0 0
    %215 = vmatprep.subr.bf16.mxu0 0
    %216 = vmatpush1.bf16.msra.mxu0 0
    %217 = vmatprep.subr.bf16.mxu0 0
    %218 = vmatpush1.bf16.msra.mxu0 0
    %219 = vmatprep.subr.bf16.mxu0 0
    %220 = vmatpush1.bf16.msra.mxu0 0
    %221 = vmatprep.subr.bf16.mxu0 0
    %222 = vmatpush1.bf16.msra.mxu0 0
    %223 = vmatprep.subr.bf16.mxu0 0
    %224 = vmatpush1.bf16.msra.mxu0 0
    %225 = vmatprep.mubr.bf16.mxu0 %v187
    %226 = vmatmul.mubr.bf16.gmra.mrb[0].mxu0 %v100
    %v227 = vpop.f32.mrb[0].mxu0
    %v228 = vadd.f32 %v126, %v227
    %v229 = vpop.f32.mrb[0].mxu0
    %v230 = vpop.f32.mrb[0].mxu0
    %v231 = vadd.f32 %v126, %v230
    %v232 = vpop.f32.mrb[0].mxu0
    %233 = vdwg.mxu0
    %v234 = vmax.f32 %v228, 0.0
    %v235 = vmax.f32 %v231, 0.0
    %v236 = vpack.c.bf16 %v235, %v234
    %v237 = vld [vmem:[%s4] sm:$0xf]
    %v238 = vld [vmem:[%s4 + $0x4] sm:$0xf]
    %v239 = vld [vmem:[%s4 + $0x8] sm:$0xf]
    %v240 = vld [vmem:[%s4 + $0xc] sm:$0xf]
    %v241 = vld [vmem:[%s6] sm:$0x1]
    %v243 = vlaneseq
    %v244 = vshrl.u32 %v243, 7
    %v245 = vsub.s32 0, %v244
    %v246 = vrot.slane %v241, %v245
    %v252 = vunpack.c.l.b16 %v237
    %v253 = vunpack.c.l.b16 %v238
    %v254 = vunpack.c.l.b16 %v239
    %v255 = vunpack.c.l.b16 %v240
    %v256 = vpack.c.b16 %v253, %v252
    %v257 = vpack.c.b16 %v255, %v254
    %vm260 = vcmask 261120
    %v262 = vsel %vm260, %v236, 0
    %264 = vmatprep.subr.bf16.mxu0 0
    %265 = vmatpush1.bf16.msra.mxu0 %v256
    %266 = vmatprep.subr.bf16.mxu0 0
    %267 = vmatpush1.bf16.msra.mxu0 %v257
    %268 = vmatprep.subr.bf16.mxu0 0
    %269 = vmatpush1.bf16.msra.mxu0 0
    %270 = vmatprep.subr.bf16.mxu0 0
    %271 = vmatpush1.bf16.msra.mxu0 0
    %272 = vmatprep.subr.bf16.mxu0 0
    %273 = vmatpush1.bf16.msra.mxu0 0
    %274 = vmatprep.subr.bf16.mxu0 0
    %275 = vmatpush1.bf16.msra.mxu0 0
    %276 = vmatprep.subr.bf16.mxu0 0
    %277 = vmatpush1.bf16.msra.mxu0 0
    %278 = vmatprep.subr.bf16.mxu0 0
    %279 = vmatpush1.bf16.msra.mxu0 0
    %280 = vmatprep.subr.bf16.mxu0 0
    %281 = vmatpush1.bf16.msra.mxu0 0
    %282 = vmatprep.subr.bf16.mxu0 0
    %283 = vmatpush1.bf16.msra.mxu0 0
    %284 = vmatprep.subr.bf16.mxu0 0
    %285 = vmatpush1.bf16.msra.mxu0 0
    %286 = vmatprep.subr.bf16.mxu0 0
    %287 = vmatpush1.bf16.msra.mxu0 0
    %288 = vmatprep.subr.bf16.mxu0 0
    %289 = vmatpush1.bf16.msra.mxu0 0
    %290 = vmatprep.subr.bf16.mxu0 0
    %291 = vmatpush1.bf16.msra.mxu0 0
    %292 = vmatprep.subr.bf16.mxu0 0
    %293 = vmatpush1.bf16.msra.mxu0 0
    %294 = vmatprep.subr.bf16.mxu0 0
    %295 = vmatpush1.bf16.msra.mxu0 0
    %296 = vmatprep.mubr.bf16.mxu0 0
    %297 = vmatmul.mubr.bf16.gmra.mrb[0].mxu0 %v262
    %v298 = vpop.f32.mrb[0].mxu0
    %v299 = vadd.f32 %v246, %v298
    %v300 = vpop.f32.mrb[0].mxu0
    %v301 = vpop.f32.mrb[0].mxu0
    %v302 = vadd.f32 %v246, %v301
    %v303 = vpop.f32.mrb[0].mxu0
    %304 = vdwg.mxu0
    %v305 = vld [vmem:[%s5] sm:$0xf]
    %v306 = vld [vmem:[%s5 + $0x4] sm:$0xf]
    %v307 = vld [vmem:[%s5 + $0x8] sm:$0xf]
    %v308 = vld [vmem:[%s5 + $0xc] sm:$0xf]
    %v313 = vunpack.c.l.b16 %v305
    %v314 = vunpack.c.l.b16 %v306
    %v315 = vunpack.c.l.b16 %v307
    %v316 = vunpack.c.l.b16 %v308
    %v317 = vpack.c.b16 %v314, %v313
    %v318 = vpack.c.b16 %v316, %v315
    %v322 = vsel %vm260, 0, 0
    %324 = vmatprep.subr.bf16.mxu0 0
    %325 = vmatpush1.bf16.msra.mxu0 %v317
    %326 = vmatprep.subr.bf16.mxu0 0
    %327 = vmatpush1.bf16.msra.mxu0 %v318
    %328 = vmatprep.subr.bf16.mxu0 0
    %329 = vmatpush1.bf16.msra.mxu0 0
    %330 = vmatprep.subr.bf16.mxu0 0
    %331 = vmatpush1.bf16.msra.mxu0 0
    %332 = vmatprep.subr.bf16.mxu0 0
    %333 = vmatpush1.bf16.msra.mxu0 0
    %334 = vmatprep.subr.bf16.mxu0 0
    %335 = vmatpush1.bf16.msra.mxu0 0
    %336 = vmatprep.subr.bf16.mxu0 0
    %337 = vmatpush1.bf16.msra.mxu0 0
    %338 = vmatprep.subr.bf16.mxu0 0
    %339 = vmatpush1.bf16.msra.mxu0 0
    %340 = vmatprep.subr.bf16.mxu0 0
    %341 = vmatpush1.bf16.msra.mxu0 0
    %342 = vmatprep.subr.bf16.mxu0 0
    %343 = vmatpush1.bf16.msra.mxu0 0
    %344 = vmatprep.subr.bf16.mxu0 0
    %345 = vmatpush1.bf16.msra.mxu0 0
    %346 = vmatprep.subr.bf16.mxu0 0
    %347 = vmatpush1.bf16.msra.mxu0 0
    %348 = vmatprep.subr.bf16.mxu0 0
    %349 = vmatpush1.bf16.msra.mxu0 0
    %350 = vmatprep.subr.bf16.mxu0 0
    %351 = vmatpush1.bf16.msra.mxu0 0
    %352 = vmatprep.subr.bf16.mxu0 0
    %353 = vmatpush1.bf16.msra.mxu0 0
    %354 = vmatprep.subr.bf16.mxu0 0
    %355 = vmatpush1.bf16.msra.mxu0 0
    %356 = vmatprep.mubr.bf16.mxu0 0
    %357 = vmatmul.mubr.bf16.gmra.mrb[0].mxu0 %v322
    %v358 = vpop.f32.mrb[0].mxu0
    %v359 = vadd.f32 0.0, %v358
    %v360 = vpop.f32.mrb[0].mxu0
    %v361 = vpop.f32.mrb[0].mxu0
    %v362 = vpop.f32.mrb[0].mxu0
    %363 = vdwg.mxu0
    %v364 = vadd.f32 %v299, %v359
    %v365 = vxor.u32 %v364, 2147483648
    %v366 = vmul.f32 %v365, 1.442695
    %v367 = vpow.pop %v366
    %v368 = vadd.f32 %v367, 1.0
    %v369 = vrcp.pop %v368
    %v370 = vmul.f32 1.0, %v369
    %v371 = vtanh.pop %v364
    %v372 = vmul.f32 %v370, 0.0
    %374 = vrot.lane.b32.xlu0 %v371, 32
    %v375 = vpop.permute.xlu0 %374
    %v377 = vmul.f32 %v370, %v375
    %379 = vrot.lane.b32.xlu0 %v377, 32
    %v380 = vpop.permute.xlu0 %379
    %v382 = vadd.f32 %v372, %v380
    %v383 = vtanh.pop %v382
    %385 = vrot.lane.b32.xlu0 %v383, 32
    %v386 = vpop.permute.xlu0 %385
    %v388 = vmul.f32 %v370, %v386
    %v389 = vpack.c.bf16 %v388, %v388
    %391 = vrot.lane.b32.xlu0 %v389, 64
    %v392 = vpop.permute.xlu0 %391
    %v394 = vsel %vm260, %v392, 0
    %396 = vmatprep.subr.bf16.mxu0 0
    %397 = vmatpush1.bf16.msra.mxu0 %v317
    %398 = vmatprep.subr.bf16.mxu0 0
    %399 = vmatpush1.bf16.msra.mxu0 %v318
    %400 = vmatprep.subr.bf16.mxu0 0
    %401 = vmatpush1.bf16.msra.mxu0 0
    %402 = vmatprep.subr.bf16.mxu0 0
    %403 = vmatpush1.bf16.msra.mxu0 0
    %404 = vmatprep.subr.bf16.mxu0 0
    %405 = vmatpush1.bf16.msra.mxu0 0
    %406 = vmatprep.subr.bf16.mxu0 0
    %407 = vmatpush1.bf16.msra.mxu0 0
    %408 = vmatprep.subr.bf16.mxu0 0
    %409 = vmatpush1.bf16.msra.mxu0 0
    %410 = vmatprep.subr.bf16.mxu0 0
    %411 = vmatpush1.bf16.msra.mxu0 0
    %412 = vmatprep.subr.bf16.mxu0 0
    %413 = vmatpush1.bf16.msra.mxu0 0
    %414 = vmatprep.subr.bf16.mxu0 0
    %415 = vmatpush1.bf16.msra.mxu0 0
    %416 = vmatprep.subr.bf16.mxu0 0
    %417 = vmatpush1.bf16.msra.mxu0 0
    %418 = vmatprep.subr.bf16.mxu0 0
    %419 = vmatpush1.bf16.msra.mxu0 0
    %420 = vmatprep.subr.bf16.mxu0 0
    %421 = vmatpush1.bf16.msra.mxu0 0
    %422 = vmatprep.subr.bf16.mxu0 0
    %423 = vmatpush1.bf16.msra.mxu0 0
    %424 = vmatprep.subr.bf16.mxu0 0
    %425 = vmatpush1.bf16.msra.mxu0 0
    %426 = vmatprep.subr.bf16.mxu0 0
    %427 = vmatpush1.bf16.msra.mxu0 0
    %428 = vmatprep.mubr.bf16.mxu0 0
    %429 = vmatmul.mubr.bf16.gmra.mrb[0].mxu0 %v394
    %v430 = vpop.f32.mrb[0].mxu0
    %v431 = vadd.f32 0.0, %v430
    %v432 = vpop.f32.mrb[0].mxu0
    %v433 = vpop.f32.mrb[0].mxu0
    %v434 = vpop.f32.mrb[0].mxu0
    %435 = vdwg.mxu0
    %v437 = vrot.slane %v431, 6
    %v439 = vadd.f32 %v299, %v437
    %v440 = vxor.u32 %v439, 2147483648
    %v441 = vmul.f32 %v440, 1.442695
    %v442 = vpow.pop %v441
    %v443 = vadd.f32 %v442, 1.0
    %v444 = vrcp.pop %v443
    %v445 = vmul.f32 1.0, %v444
    %v446 = vtanh.pop %v439
    %v448 = vrot.slane %v382, 6
    %v450 = vmul.f32 %v445, %v448
    %452 = vrot.lane.b32.xlu0 %v446, 32
    %v453 = vpop.permute.xlu0 %452
    %v455 = vmul.f32 %v445, %v453
    %457 = vrot.lane.b32.xlu0 %v455, 32
    %v458 = vpop.permute.xlu0 %457
    %v460 = vadd.f32 %v450, %v458
    %v461 = vtanh.pop %v460
    %463 = vrot.lane.b32.xlu0 %v461, 32
    %v464 = vpop.permute.xlu0 %463
    %v466 = vmul.f32 %v445, %v464
    %v467 = vpack.c.bf16 %v466, %v466
    %v469 = vrot.slane %v467, 1
    %470 = vrot.lane.b32.xlu0 %v469, 64
    %v471 = vpop.permute.xlu0 %470
    %v473 = vsel %vm260, %v471, 0
    %475 = vmatprep.subr.bf16.mxu0 0
    %476 = vmatpush1.bf16.msra.mxu0 %v317
    %477 = vmatprep.subr.bf16.mxu0 0
    %478 = vmatpush1.bf16.msra.mxu0 %v318
    %479 = vmatprep.subr.bf16.mxu0 0
    %480 = vmatpush1.bf16.msra.mxu0 0
    %481 = vmatprep.subr.bf16.mxu0 0
    %482 = vmatpush1.bf16.msra.mxu0 0
    %483 = vmatprep.subr.bf16.mxu0 0
    %484 = vmatpush1.bf16.msra.mxu0 0
    %485 = vmatprep.subr.bf16.mxu0 0
    %486 = vmatpush1.bf16.msra.mxu0 0
    %487 = vmatprep.subr.bf16.mxu0 0
    %488 = vmatpush1.bf16.msra.mxu0 0
    %489 = vmatprep.subr.bf16.mxu0 0
    %490 = vmatpush1.bf16.msra.mxu0 0
    %491 = vmatprep.subr.bf16.mxu0 0
    %492 = vmatpush1.bf16.msra.mxu0 0
    %493 = vmatprep.subr.bf16.mxu0 0
    %494 = vmatpush1.bf16.msra.mxu0 0
    %495 = vmatprep.subr.bf16.mxu0 0
    %496 = vmatpush1.bf16.msra.mxu0 0
    %497 = vmatprep.subr.bf16.mxu0 0
    %498 = vmatpush1.bf16.msra.mxu0 0
    %499 = vmatprep.subr.bf16.mxu0 0
    %500 = vmatpush1.bf16.msra.mxu0 0
    %501 = vmatprep.subr.bf16.mxu0 0
    %502 = vmatpush1.bf16.msra.mxu0 0
    %503 = vmatprep.subr.bf16.mxu0 0
    %504 = vmatpush1.bf16.msra.mxu0 0
    %505 = vmatprep.subr.bf16.mxu0 0
    %506 = vmatpush1.bf16.msra.mxu0 0
    %507 = vmatprep.mubr.bf16.mxu0 0
    %508 = vmatmul.mubr.bf16.gmra.mrb[0].mxu0 %v473
    %v509 = vpop.f32.mrb[0].mxu0
    %v510 = vadd.f32 0.0, %v509
    %v511 = vpop.f32.mrb[0].mxu0
    %v512 = vpop.f32.mrb[0].mxu0
    %v513 = vpop.f32.mrb[0].mxu0
    %514 = vdwg.mxu0
    %v516 = vrot.slane %v510, 4
    %v518 = vadd.f32 %v299, %v516
    %v519 = vxor.u32 %v518, 2147483648
    %v520 = vmul.f32 %v519, 1.442695
    %v521 = vpow.pop %v520
    %v522 = vadd.f32 %v521, 1.0
    %v523 = vrcp.pop %v522
    %v524 = vmul.f32 1.0, %v523
    %v525 = vtanh.pop %v518
    %v527 = vrot.slane %v460, 6
    %v529 = vmul.f32 %v524, %v527
    %531 = vrot.lane.b32.xlu0 %v525, 32
    %v532 = vpop.permute.xlu0 %531
    %v534 = vmul.f32 %v524, %v532
    %536 = vrot.lane.b32.xlu0 %v534, 32
    %v537 = vpop.permute.xlu0 %536
    %v539 = vadd.f32 %v529, %v537
    %v540 = vtanh.pop %v539
    %542 = vrot.lane.b32.xlu0 %v540, 32
    %v543 = vpop.permute.xlu0 %542
    %v545 = vmul.f32 %v524, %v543
    %v546 = vpack.c.bf16 %v545, %v545
    %v548 = vrot.slane %v546, 2
    %549 = vrot.lane.b32.xlu0 %v548, 64
    %v550 = vpop.permute.xlu0 %549
    %v552 = vsel %vm260, %v550, 0
    %554 = vmatprep.subr.bf16.mxu0 0
    %555 = vmatpush1.bf16.msra.mxu0 %v317
    %556 = vmatprep.subr.bf16.mxu0 0
    %557 = vmatpush1.bf16.msra.mxu0 %v318
    %558 = vmatprep.subr.bf16.mxu0 0
    %559 = vmatpush1.bf16.msra.mxu0 0
    %560 = vmatprep.subr.bf16.mxu0 0
    %561 = vmatpush1.bf16.msra.mxu0 0
    %562 = vmatprep.subr.bf16.mxu0 0
    %563 = vmatpush1.bf16.msra.mxu0 0
    %564 = vmatprep.subr.bf16.mxu0 0
    %565 = vmatpush1.bf16.msra.mxu0 0
    %566 = vmatprep.subr.bf16.mxu0 0
    %567 = vmatpush1.bf16.msra.mxu0 0
    %568 = vmatprep.subr.bf16.mxu0 0
    %569 = vmatpush1.bf16.msra.mxu0 0
    %570 = vmatprep.subr.bf16.mxu0 0
    %571 = vmatpush1.bf16.msra.mxu0 0
    %572 = vmatprep.subr.bf16.mxu0 0
    %573 = vmatpush1.bf16.msra.mxu0 0
    %574 = vmatprep.subr.bf16.mxu0 0
    %575 = vmatpush1.bf16.msra.mxu0 0
    %576 = vmatprep.subr.bf16.mxu0 0
    %577 = vmatpush1.bf16.msra.mxu0 0
    %578 = vmatprep.subr.bf16.mxu0 0
    %579 = vmatpush1.bf16.msra.mxu0 0
    %580 = vmatprep.subr.bf16.mxu0 0
    %581 = vmatpush1.bf16.msra.mxu0 0
    %582 = vmatprep.subr.bf16.mxu0 0
    %583 = vmatpush1.bf16.msra.mxu0 0
    %584 = vmatprep.subr.bf16.mxu0 0
    %585 = vmatpush1.bf16.msra.mxu0 0
    %586 = vmatprep.mubr.bf16.mxu0 0
    %587 = vmatmul.mubr.bf16.gmra.mrb[0].mxu0 %v552
    %v588 = vpop.f32.mrb[0].mxu0
    %v589 = vadd.f32 0.0, %v588
    %v590 = vpop.f32.mrb[0].mxu0
    %v591 = vpop.f32.mrb[0].mxu0
    %v592 = vpop.f32.mrb[0].mxu0
    %593 = vdwg.mxu0
    %v595 = vrot.slane %v589, 2
    %v597 = vadd.f32 %v299, %v595
    %v598 = vxor.u32 %v597, 2147483648
    %v599 = vmul.f32 %v598, 1.442695
    %v600 = vpow.pop %v599
    %v601 = vadd.f32 %v600, 1.0
    %v602 = vrcp.pop %v601
    %v603 = vmul.f32 1.0, %v602
    %v604 = vtanh.pop %v597
    %v606 = vrot.slane %v539, 6
    %v608 = vmul.f32 %v603, %v606
    %610 = vrot.lane.b32.xlu0 %v604, 32
    %v611 = vpop.permute.xlu0 %610
    %v613 = vmul.f32 %v603, %v611
    %615 = vrot.lane.b32.xlu0 %v613, 32
    %v616 = vpop.permute.xlu0 %615
    %v618 = vadd.f32 %v608, %v616
    %v619 = vtanh.pop %v618
    %621 = vrot.lane.b32.xlu0 %v619, 32
    %v622 = vpop.permute.xlu0 %621
    %v624 = vmul.f32 %v603, %v622
    %v625 = vpack.c.bf16 %v624, %v624
    %v627 = vrot.slane %v625, 3
    %628 = vrot.lane.b32.xlu0 %v627, 64
    %v629 = vpop.permute.xlu0 %628
    %v631 = vsel %vm260, %v629, 0
    %633 = vmatprep.subr.bf16.mxu0 0
    %634 = vmatpush1.bf16.msra.mxu0 %v317
    %635 = vmatprep.subr.bf16.mxu0 0
    %636 = vmatpush1.bf16.msra.mxu0 %v318
    %637 = vmatprep.subr.bf16.mxu0 0
    %638 = vmatpush1.bf16.msra.mxu0 0
    %639 = vmatprep.subr.bf16.mxu0 0
    %640 = vmatpush1.bf16.msra.mxu0 0
    %641 = vmatprep.subr.bf16.mxu0 0
    %642 = vmatpush1.bf16.msra.mxu0 0
    %643 = vmatprep.subr.bf16.mxu0 0
    %644 = vmatpush1.bf16.msra.mxu0 0
    %645 = vmatprep.subr.bf16.mxu0 0
    %646 = vmatpush1.bf16.msra.mxu0 0
    %647 = vmatprep.subr.bf16.mxu0 0
    %648 = vmatpush1.bf16.msra.mxu0 0
    %649 = vmatprep.subr.bf16.mxu0 0
    %650 = vmatpush1.bf16.msra.mxu0 0
    %651 = vmatprep.subr.bf16.mxu0 0
    %652 = vmatpush1.bf16.msra.mxu0 0
    %653 = vmatprep.subr.bf16.mxu0 0
    %654 = vmatpush1.bf16.msra.mxu0 0
    %655 = vmatprep.subr.bf16.mxu0 0
    %656 = vmatpush1.bf16.msra.mxu0 0
    %657 = vmatprep.subr.bf16.mxu0 0
    %658 = vmatpush1.bf16.msra.mxu0 0
    %659 = vmatprep.subr.bf16.mxu0 0
    %660 = vmatpush1.bf16.msra.mxu0 0
    %661 = vmatprep.subr.bf16.mxu0 0
    %662 = vmatpush1.bf16.msra.mxu0 0
    %663 = vmatprep.subr.bf16.mxu0 0
    %664 = vmatpush1.bf16.msra.mxu0 0
    %665 = vmatprep.mubr.bf16.mxu0 0
    %666 = vmatmul.mubr.bf16.gmra.mrb[0].mxu0 %v631
    %v667 = vpop.f32.mrb[0].mxu0
    %v668 = vadd.f32 0.0, %v667
    %v669 = vpop.f32.mrb[0].mxu0
    %v670 = vpop.f32.mrb[0].mxu0
    %v671 = vpop.f32.mrb[0].mxu0
    %672 = vdwg.mxu0
    %v673 = vadd.f32 %v302, %v668
    %v674 = vxor.u32 %v673, 2147483648
    %v675 = vmul.f32 %v674, 1.442695
    %v676 = vpow.pop %v675
    %v677 = vadd.f32 %v676, 1.0
    %v678 = vrcp.pop %v677
    %v679 = vmul.f32 1.0, %v678
    %v680 = vtanh.pop %v673
    %v682 = vrot.slane %v618, 6
    %v684 = vmul.f32 %v679, %v682
    %686 = vrot.lane.b32.xlu0 %v680, 32
    %v687 = vpop.permute.xlu0 %686
    %v689 = vmul.f32 %v679, %v687
    %691 = vrot.lane.b32.xlu0 %v689, 32
    %v692 = vpop.permute.xlu0 %691
    %v694 = vadd.f32 %v684, %v692
    %v695 = vtanh.pop %v694
    %697 = vrot.lane.b32.xlu0 %v695, 32
    %v698 = vpop.permute.xlu0 %697
    %v700 = vmul.f32 %v679, %v698
    %v701 = vpack.c.bf16 %v700, %v700
    %703 = vrot.lane.b32.xlu0 %v701, 64
    %v704 = vpop.permute.xlu0 %703
    %v706 = vsel %vm260, %v704, 0
    %708 = vmatprep.subr.bf16.mxu0 0
    %709 = vmatpush1.bf16.msra.mxu0 %v317
    %710 = vmatprep.subr.bf16.mxu0 0
    %711 = vmatpush1.bf16.msra.mxu0 %v318
    %712 = vmatprep.subr.bf16.mxu0 0
    %713 = vmatpush1.bf16.msra.mxu0 0
    %714 = vmatprep.subr.bf16.mxu0 0
    %715 = vmatpush1.bf16.msra.mxu0 0
    %716 = vmatprep.subr.bf16.mxu0 0
    %717 = vmatpush1.bf16.msra.mxu0 0
    %718 = vmatprep.subr.bf16.mxu0 0
    %719 = vmatpush1.bf16.msra.mxu0 0
    %720 = vmatprep.subr.bf16.mxu0 0
    %721 = vmatpush1.bf16.msra.mxu0 0
    %722 = vmatprep.subr.bf16.mxu0 0
    %723 = vmatpush1.bf16.msra.mxu0 0
    %724 = vmatprep.subr.bf16.mxu0 0
    %725 = vmatpush1.bf16.msra.mxu0 0
    %726 = vmatprep.subr.bf16.mxu0 0
    %727 = vmatpush1.bf16.msra.mxu0 0
    %728 = vmatprep.subr.bf16.mxu0 0
    %729 = vmatpush1.bf16.msra.mxu0 0
    %730 = vmatprep.subr.bf16.mxu0 0
    %731 = vmatpush1.bf16.msra.mxu0 0
    %732 = vmatprep.subr.bf16.mxu0 0
    %733 = vmatpush1.bf16.msra.mxu0 0
    %734 = vmatprep.subr.bf16.mxu0 0
    %735 = vmatpush1.bf16.msra.mxu0 0
    %736 = vmatprep.subr.bf16.mxu0 0
    %737 = vmatpush1.bf16.msra.mxu0 0
    %738 = vmatprep.subr.bf16.mxu0 0
    %739 = vmatpush1.bf16.msra.mxu0 0
    %740 = vmatprep.mubr.bf16.mxu0 0
    %741 = vmatmul.mubr.bf16.gmra.mrb[0].mxu0 %v706
    %v742 = vpop.f32.mrb[0].mxu0
    %v743 = vadd.f32 0.0, %v742
    %v744 = vpop.f32.mrb[0].mxu0
    %v745 = vpop.f32.mrb[0].mxu0
    %v746 = vpop.f32.mrb[0].mxu0
    %747 = vdwg.mxu0
    %v749 = vrot.slane %v743, 6
    %v751 = vadd.f32 %v302, %v749
    %v752 = vxor.u32 %v751, 2147483648
    %v753 = vmul.f32 %v752, 1.442695
    %v754 = vpow.pop %v753
    %v755 = vadd.f32 %v754, 1.0
    %v756 = vrcp.pop %v755
    %v757 = vmul.f32 1.0, %v756
    %v758 = vtanh.pop %v751
    %v760 = vrot.slane %v694, 6
    %v762 = vmul.f32 %v757, %v760
    %764 = vrot.lane.b32.xlu0 %v758, 32
    %v765 = vpop.permute.xlu0 %764
    %v767 = vmul.f32 %v757, %v765
    %769 = vrot.lane.b32.xlu0 %v767, 32
    %v770 = vpop.permute.xlu0 %769
    %v772 = vadd.f32 %v762, %v770
    %v773 = vtanh.pop %v772
    %775 = vrot.lane.b32.xlu0 %v773, 32
    %v776 = vpop.permute.xlu0 %775
    %v778 = vmul.f32 %v757, %v776
    %v779 = vpack.c.bf16 %v778, %v778
    %v781 = vrot.slane %v779, 1
    %782 = vrot.lane.b32.xlu0 %v781, 64
    %v783 = vpop.permute.xlu0 %782
    %v785 = vsel %vm260, %v783, 0
    %787 = vmatprep.subr.bf16.mxu0 0
    %788 = vmatpush1.bf16.msra.mxu0 %v317
    %789 = vmatprep.subr.bf16.mxu0 0
    %790 = vmatpush1.bf16.msra.mxu0 %v318
    %791 = vmatprep.subr.bf16.mxu0 0
    %792 = vmatpush1.bf16.msra.mxu0 0
    %793 = vmatprep.subr.bf16.mxu0 0
    %794 = vmatpush1.bf16.msra.mxu0 0
    %795 = vmatprep.subr.bf16.mxu0 0
    %796 = vmatpush1.bf16.msra.mxu0 0
    %797 = vmatprep.subr.bf16.mxu0 0
    %798 = vmatpush1.bf16.msra.mxu0 0
    %799 = vmatprep.subr.bf16.mxu0 0
    %800 = vmatpush1.bf16.msra.mxu0 0
    %801 = vmatprep.subr.bf16.mxu0 0
    %802 = vmatpush1.bf16.msra.mxu0 0
    %803 = vmatprep.subr.bf16.mxu0 0
    %804 = vmatpush1.bf16.msra.mxu0 0
    %805 = vmatprep.subr.bf16.mxu0 0
    %806 = vmatpush1.bf16.msra.mxu0 0
    %807 = vmatprep.subr.bf16.mxu0 0
    %808 = vmatpush1.bf16.msra.mxu0 0
    %809 = vmatprep.subr.bf16.mxu0 0
    %810 = vmatpush1.bf16.msra.mxu0 0
    %811 = vmatprep.subr.bf16.mxu0 0
    %812 = vmatpush1.bf16.msra.mxu0 0
    %813 = vmatprep.subr.bf16.mxu0 0
    %814 = vmatpush1.bf16.msra.mxu0 0
    %815 = vmatprep.subr.bf16.mxu0 0
    %816 = vmatpush1.bf16.msra.mxu0 0
    %817 = vmatprep.subr.bf16.mxu0 0
    %818 = vmatpush1.bf16.msra.mxu0 0
    %819 = vmatprep.mubr.bf16.mxu0 0
    %820 = vmatmul.mubr.bf16.gmra.mrb[0].mxu0 %v785
    %v821 = vpop.f32.mrb[0].mxu0
    %v822 = vadd.f32 0.0, %v821
    %v823 = vpop.f32.mrb[0].mxu0
    %v824 = vpop.f32.mrb[0].mxu0
    %v825 = vpop.f32.mrb[0].mxu0
    %826 = vdwg.mxu0
    %v828 = vrot.slane %v822, 4
    %v830 = vadd.f32 %v302, %v828
    %v831 = vxor.u32 %v830, 2147483648
    %v832 = vmul.f32 %v831, 1.442695
    %v833 = vpow.pop %v832
    %v834 = vadd.f32 %v833, 1.0
    %v835 = vrcp.pop %v834
    %v836 = vmul.f32 1.0, %v835
    %v837 = vtanh.pop %v830
    %v839 = vrot.slane %v772, 6
    %v841 = vmul.f32 %v836, %v839
    %843 = vrot.lane.b32.xlu0 %v837, 32
    %v844 = vpop.permute.xlu0 %843
    %v846 = vmul.f32 %v836, %v844
    %848 = vrot.lane.b32.xlu0 %v846, 32
    %v849 = vpop.permute.xlu0 %848
    %v851 = vadd.f32 %v841, %v849
    %v852 = vtanh.pop %v851
    %854 = vrot.lane.b32.xlu0 %v852, 32
    %v855 = vpop.permute.xlu0 %854
    %v857 = vmul.f32 %v836, %v855
    %v858 = vpack.c.bf16 %v857, %v857
    %v860 = vrot.slane %v858, 2
    %861 = vrot.lane.b32.xlu0 %v860, 64
    %v862 = vpop.permute.xlu0 %861
    %v864 = vsel %vm260, %v862, 0
    %866 = vmatprep.subr.bf16.mxu0 0
    %867 = vmatpush1.bf16.msra.mxu0 %v317
    %868 = vmatprep.subr.bf16.mxu0 0
    %869 = vmatpush1.bf16.msra.mxu0 %v318
    %870 = vmatprep.subr.bf16.mxu0 0
    %871 = vmatpush1.bf16.msra.mxu0 0
    %872 = vmatprep.subr.bf16.mxu0 0
    %873 = vmatpush1.bf16.msra.mxu0 0
    %874 = vmatprep.subr.bf16.mxu0 0
    %875 = vmatpush1.bf16.msra.mxu0 0
    %876 = vmatprep.subr.bf16.mxu0 0
    %877 = vmatpush1.bf16.msra.mxu0 0
    %878 = vmatprep.subr.bf16.mxu0 0
    %879 = vmatpush1.bf16.msra.mxu0 0
    %880 = vmatprep.subr.bf16.mxu0 0
    %881 = vmatpush1.bf16.msra.mxu0 0
    %882 = vmatprep.subr.bf16.mxu0 0
    %883 = vmatpush1.bf16.msra.mxu0 0
    %884 = vmatprep.subr.bf16.mxu0 0
    %885 = vmatpush1.bf16.msra.mxu0 0
    %886 = vmatprep.subr.bf16.mxu0 0
    %887 = vmatpush1.bf16.msra.mxu0 0
    %888 = vmatprep.subr.bf16.mxu0 0
    %889 = vmatpush1.bf16.msra.mxu0 0
    %890 = vmatprep.subr.bf16.mxu0 0
    %891 = vmatpush1.bf16.msra.mxu0 0
    %892 = vmatprep.subr.bf16.mxu0 0
    %893 = vmatpush1.bf16.msra.mxu0 0
    %894 = vmatprep.subr.bf16.mxu0 0
    %895 = vmatpush1.bf16.msra.mxu0 0
    %896 = vmatprep.subr.bf16.mxu0 0
    %897 = vmatpush1.bf16.msra.mxu0 0
    %898 = vmatprep.mubr.bf16.mxu0 0
    %899 = vmatmul.mubr.bf16.gmra.mrb[0].mxu0 %v864
    %v900 = vpop.f32.mrb[0].mxu0
    %v901 = vadd.f32 0.0, %v900
    %v902 = vpop.f32.mrb[0].mxu0
    %v903 = vpop.f32.mrb[0].mxu0
    %v904 = vpop.f32.mrb[0].mxu0
    %905 = vdwg.mxu0
    %v907 = vrot.slane %v901, 2
    %v909 = vadd.f32 %v302, %v907
    %v910 = vxor.u32 %v909, 2147483648
    %v911 = vmul.f32 %v910, 1.442695
    %v912 = vpow.pop %v911
    %v913 = vadd.f32 %v912, 1.0
    %v914 = vrcp.pop %v913
    %v915 = vmul.f32 1.0, %v914
    %v916 = vtanh.pop %v909
    %v918 = vrot.slane %v851, 6
    %v920 = vmul.f32 %v915, %v918
    %922 = vrot.lane.b32.xlu0 %v916, 32
    %v923 = vpop.permute.xlu0 %922
    %v925 = vmul.f32 %v915, %v923
    %927 = vrot.lane.b32.xlu0 %v925, 32
    %v928 = vpop.permute.xlu0 %927
    %v930 = vadd.f32 %v920, %v928
    %v931 = vtanh.pop %v930
    %933 = vrot.lane.b32.xlu0 %v931, 32
    %v934 = vpop.permute.xlu0 %933
    %v936 = vmul.f32 %v915, %v934
    %v937 = vpack.c.bf16 %v936, %v936
    %v938 = vld [vmem:[%s7] sm:$0xf]
    %v939 = vld [vmem:[%s7 + $0x4] sm:$0xf]
    %v940 = vld [vmem:[%s7 + $0x8] sm:$0xf]
    %v941 = vld [vmem:[%s7 + $0xc] sm:$0xf]
    %v942 = vld [vmem:[%s1] sm:$0x3]
    %v943 = vpack.c.bf16 %v942, %v942
    %v944 = vld [vmem:[%s8] sm:$0xf]
    %vm945 = vcmask 64512
    %v947 = vsel %vm945, %v943, 0
    %vm949 = vcmask 1043456
    %v951 = vsel %vm949, %v944, 0
    %953 = vmatprep.subr.bf16.mxu0 0
    %954 = vmatpush1.bf16.msra.mxu0 %v951
    %955 = vmatprep.subr.bf16.mxu0 0
    %956 = vmatpush1.bf16.msra.mxu0 0
    %957 = vmatprep.subr.bf16.mxu0 0
    %958 = vmatpush1.bf16.msra.mxu0 0
    %959 = vmatprep.subr.bf16.mxu0 0
    %960 = vmatpush1.bf16.msra.mxu0 0
    %961 = vmatprep.subr.bf16.mxu0 0
    %962 = vmatpush1.bf16.msra.mxu0 0
    %963 = vmatprep.subr.bf16.mxu0 0
    %964 = vmatpush1.bf16.msra.mxu0 0
    %965 = vmatprep.subr.bf16.mxu0 0
    %966 = vmatpush1.bf16.msra.mxu0 0
    %967 = vmatprep.subr.bf16.mxu0 0
    %968 = vmatpush1.bf16.msra.mxu0 0
    %969 = vmatprep.subr.bf16.mxu0 0
    %970 = vmatpush1.bf16.msra.mxu0 0
    %971 = vmatprep.subr.bf16.mxu0 0
    %972 = vmatpush1.bf16.msra.mxu0 0
    %973 = vmatprep.subr.bf16.mxu0 0
    %974 = vmatpush1.bf16.msra.mxu0 0
    %975 = vmatprep.subr.bf16.mxu0 0
    %976 = vmatpush1.bf16.msra.mxu0 0
    %977 = vmatprep.subr.bf16.mxu0 0
    %978 = vmatpush1.bf16.msra.mxu0 0
    %979 = vmatprep.subr.bf16.mxu0 0
    %980 = vmatpush1.bf16.msra.mxu0 0
    %981 = vmatprep.subr.bf16.mxu0 0
    %982 = vmatpush1.bf16.msra.mxu0 0
    %983 = vmatprep.subr.bf16.mxu0 0
    %984 = vmatpush1.bf16.msra.mxu0 0
    %985 = vmatprep.mubr.bf16.mxu0 0
    %986 = vmatmul.mubr.bf16.gmra.mrb[0].mxu0 %v947
    %v987 = vpop.f32.mrb[0].mxu0
    %v988 = vadd.f32 0.0, %v987
    %v989 = vpop.f32.mrb[0].mxu0
    %v990 = vpop.f32.mrb[0].mxu0
    %v991 = vpop.f32.mrb[0].mxu0
    %992 = vdwg.mxu0
    %v994 = vrot.slane %v937, 3
    %995 = vrot.lane.b32.xlu0 %v994, 64
    %v996 = vpop.permute.xlu0 %995
    %v1001 = vunpack.c.l.b16 %v938
    %v1002 = vunpack.c.l.b16 %v939
    %v1003 = vunpack.c.l.b16 %v940
    %v1004 = vunpack.c.l.b16 %v941
    %v1005 = vpack.c.b16 %v1002, %v1001
    %v1006 = vpack.c.b16 %v1004, %v1003
    %v1010 = vsel %vm260, %v996, 0
    %1012 = vmatprep.subr.bf16.mxu0 0
    %1013 = vmatpush1.bf16.msra.mxu0 %v1005
    %1014 = vmatprep.subr.bf16.mxu0 0
    %1015 = vmatpush1.bf16.msra.mxu0 %v1006
    %1016 = vmatprep.subr.bf16.mxu0 0
    %1017 = vmatpush1.bf16.msra.mxu0 0
    %1018 = vmatprep.subr.bf16.mxu0 0
    %1019 = vmatpush1.bf16.msra.mxu0 0
    %1020 = vmatprep.subr.bf16.mxu0 0
    %1021 = vmatpush1.bf16.msra.mxu0 0
    %1022 = vmatprep.subr.bf16.mxu0 0
    %1023 = vmatpush1.bf16.msra.mxu0 0
    %1024 = vmatprep.subr.bf16.mxu0 0
    %1025 = vmatpush1.bf16.msra.mxu0 0
    %1026 = vmatprep.subr.bf16.mxu0 0
    %1027 = vmatpush1.bf16.msra.mxu0 0
    %1028 = vmatprep.subr.bf16.mxu0 0
    %1029 = vmatpush1.bf16.msra.mxu0 0
    %1030 = vmatprep.subr.bf16.mxu0 0
    %1031 = vmatpush1.bf16.msra.mxu0 0
    %1032 = vmatprep.subr.bf16.mxu0 0
    %1033 = vmatpush1.bf16.msra.mxu0 0
    %1034 = vmatprep.subr.bf16.mxu0 0
    %1035 = vmatpush1.bf16.msra.mxu0 0
    %1036 = vmatprep.subr.bf16.mxu0 0
    %1037 = vmatpush1.bf16.msra.mxu0 0
    %1038 = vmatprep.subr.bf16.mxu0 0
    %1039 = vmatpush1.bf16.msra.mxu0 0
    %1040 = vmatprep.subr.bf16.mxu0 0
    %1041 = vmatpush1.bf16.msra.mxu0 0
    %1042 = vmatprep.subr.bf16.mxu0 0
    %1043 = vmatpush1.bf16.msra.mxu0 0
    %1044 = vmatprep.mubr.bf16.mxu0 0
    %1045 = vmatmul.mubr.bf16.gmra.mrb[0].mxu0 %v1010
    %v1046 = vpop.f32.mrb[0].mxu0
    %v1047 = vadd.f32 %v988, %v1046
    %v1048 = vpop.f32.mrb[0].mxu0
    %v1049 = vpop.f32.mrb[0].mxu0
    %v1050 = vpop.f32.mrb[0].mxu0
    %1051 = vdwg.mxu0
    %v1052 = vld [vmem:[%s9] sm:$0x1]
    %v1054 = vlaneseq
    %v1055 = vshrl.u32 %v1054, 7
    %v1056 = vsub.s32 0, %v1055
    %v1057 = vrot.slane %v1052, %v1056
    %v1059 = vadd.f32 %v1047, %v1057
    %1060 = vst [vmem:[#allocation2] sm:$0x3] %v1059
    // Predicated region
    $region42: #{tpu_custom_call.1} parent=1 // pred_check
      _
    $region43: #{tpu_custom_call.1} parent=1 // pred_check_branch
      %1062 = sbr.rel (0) target = $region45
    $region44: #{tpu_custom_call.1} parent=1 // pred_region
      %s1064 = ssub.s32 32, 32
      %1065 = vsyncadd [#allocation3], %s1064
      %s1067 = sshll.u32 [#allocation2], 4
      %s1068 = int_to_ptr.vmem [resolvable:$true] %s1067
      %1070 = dma.vmem_to_hbm [thread:$0]  %s1068, 32, %s10, [#allocation3]
    $region45: #{tpu_custom_call.1} parent=1 // pred_fallthru
      _
    // Predicated region
    $region46: #{tpu_custom_call.1} parent=1 // pred_check
      _
    $region47: #{tpu_custom_call.1} parent=1 // pred_check_branch
      %1072 = sbr.rel (0) target = $region49
    $region48: #{tpu_custom_call.1} parent=1 // pred_region
      %1073 = dma.done [#allocation3], 32
    $region49: #{tpu_custom_call.1} parent=1 // pred_fallthru
      _
    %1074 = vsyncpa [#allocation3], 1

</llo_original>
